<compile_context>
chip_gen: v7x
topology: tpu7x:2x2x1
jax: 0.10.0
libtpu: 0.0.40
codegen_flags: <defaults>
</compile_context>

<pallas_src>
from functools import partial

import numpy as np
import jax
import jax.numpy as jnp
from jax.experimental import pallas as pl
from jax.experimental.pallas import tpu as pltpu


def force_pair(v):
    if isinstance(v, tuple):
        if len(v) != 2:
            raise ValueError(v)
        return (int(v[0]), int(v[1]))
    return (int(v), int(v))


def _round_up(x, m):
    return ((x + m - 1) // m) * m


def _device_caps():
    """Return (vmem_capacity_bytes, native MXU N width) for this TPU generation."""
    kind = ""
    try:
        kind = jax.devices()[0].device_kind.lower()
    except Exception:
        pass
    vmem_cap = None
    try:
        vmem_cap = int(pltpu.get_tpu_info().vmem_capacity_bytes)
    except Exception:
        vmem_cap = None
    if not vmem_cap or vmem_cap <= 0:
        vmem_cap = (64 << 20) if "v7" in kind else (128 << 20)
    native_n = 128 if "v5" in kind else 256     # v5e MXU is 4x128^2
    return vmem_cap, native_n


# ----------------------------- Pallas kernel ------------------------------ #
def _make_conv_kernel(taps, Kt, TOH, OW_pad, sh, sw):
    """taps: list of (kh, kw); kw is None when KW*C is pre-packed into lanes.
    Kt = per-tap contraction depth (KW*C packed, else C)."""
    TM = TOH * OW_pad
    row_step = TOH * sh

    def kernel(x_ref, w_ref, o_ref):
        # x_ref: (Hp, W_in, L)     bf16  whole padded image (resident across n, m)
        # w_ref: (n_taps, Kt, TN)  bf16
        # o_ref: (TM, TN)          f32   written exactly once per grid step
        m = pl.program_id(2)
        row0 = m * row_step
        if row_step % 8 == 0:
            row0 = pl.multiple_of(row0, 8)
        acc = None
        for t, (kh, kw) in enumerate(taps):
            rows = pl.ds(row0 + kh, TOH) if sh == 1 else pl.ds(row0 + kh, TOH, sh)
            if kw is None:
                patch = x_ref[rows, :, :]                    # (TOH, OW_pad, KW*C)
            else:
                cols = pl.ds(kw, OW_pad) if sw == 1 else pl.ds(kw, OW_pad, sw)
                patch = x_ref[rows, cols, :]                 # (TOH, OW_pad, C)
            lhs = patch.reshape(TM, Kt)                      # tile-trivial: OW_pad % 16 == 0
            contrib = jnp.dot(lhs, w_ref[t], preferred_element_type=jnp.float32)
            acc = contrib if acc is None else acc + contrib
        o_ref[...] = acc                                     # single store, no RMW

    return kernel


# ------------------------------ Conv2d glue ------------------------------- #
@partial(jax.jit, static_argnums=(2, 3))
def conv2d_pallas(x, weight, stride=1, padding=0):
    """x: (B, C, H, W), weight: (O, C, KH, KW) -> (B, O, OH, OW) float32.

    torch.nn.functional.conv2d(bias=None) semantics; bf16 MXU inputs with
    f32 accumulation.
    """
    sh, sw = force_pair(stride)
    ph, pw = force_pair(padding)
    B, C, H, W = x.shape
    O, C2, KH, KW = weight.shape
    assert C == C2

    OH = (H + 2 * ph - KH) // sh + 1
    OW = (W + 2 * pw - KW) // sw + 1

    vmem_cap, native_n = _device_caps()

    # Lane-dense output channels.
    O_pad = _round_up(O, 128)
    TN = native_n if O_pad % native_n == 0 else 128
    n_blk = O_pad // TN

    # OW padded to a multiple of 16 so the in-kernel reshape is tile-trivial.
    OW_pad = _round_up(OW, 16)

    # Small-C regime: pack KW taps into the contraction (K = KW*C per dot) and
    # pre-apply the W stride so in-kernel sublane reads are unit-stride.
    pack_kw = (KW * C) <= 128

    Wp = max(W + 2 * pw, (OW_pad - 1) * sw + KW)        # extra right zero-pad

    # ---- output-row tile (TOH): generation-aware VMEM budget --------------
    lane = KW * C if pack_kw else C
    w_cols = OW_pad if pack_kw else Wp
    hp_ub = max(H + 2 * ph, 2 * OH * sh + KH)           # conservative Hp bound
    x_blk_ub = hp_ub * w_cols * lane * 2
    w_blk_ub = KH * KW * C * TN * 2
    usable = int(vmem_cap * 0.8)
    fixed = 2 * (x_blk_ub + w_blk_ub) + (2 << 20)
    per_row = OW_pad * TN * 4 * 3                       # dbl-buffered out + f32 acc
    toh_budget = max(1, (usable - fixed) // per_row)
    toh_cap = max(1, (256 << 10) // (OW_pad * TN * 4))  # keep acc near-register
    TOH = max(1, min(toh_budget, toh_cap, OH))
    if TOH >= 8:
        TOH -= TOH % 8                                  # aligned row starts
    OH_pad = _round_up(OH, TOH)
    n_m = OH_pad // TOH
    TM = TOH * OW_pad
    M_pad = OH_pad * OW_pad

    Hp = max(H + 2 * ph, (OH_pad - 1) * sh + KH)        # bottom zero-pad for OH_pad

    # ---- activations: bf16 cast BEFORE the NCHW->NHWC transpose ------------
    x_nhwc = jnp.transpose(x.astype(jnp.bfloat16), (0, 2, 3, 1))
    x_pad = jnp.pad(x_nhwc, ((0, 0), (ph, Hp - H - ph), (pw, Wp - W - pw), (0, 0)))
    if pack_kw:
        # (B, Hp, OW_pad, KW*C): lanes hold (kw, c); W stride applied here.
        x_in = jnp.concatenate(
            [x_pad[:, :, kw: kw + (OW_pad - 1) * sw + 1: sw, :] for kw in range(KW)],
            axis=-1)
    else:
        x_in = x_pad

    # ---- weights: (O, C, KH, KW) -> (n_taps, Kt, O_pad) bf16 ---------------
    w_t = jnp.transpose(weight.astype(jnp.float32), (2, 3, 1, 0))   # (KH,KW,C,O)
    wmat = w_t.reshape(KH, KW * C, O) if pack_kw else w_t.reshape(KH * KW, C, O)
    if O_pad != O:
        wmat = jnp.pad(wmat, ((0, 0), (0, 0), (0, O_pad - O)))
    wmat = wmat.astype(jnp.bfloat16)

    if pack_kw:
        taps, Kt = [(kh, None) for kh in range(KH)], KW * C
    else:
        taps, Kt = [(kh, kw) for kh in range(KH) for kw in range(KW)], C
    kernel = _make_conv_kernel(taps, Kt, TOH, OW_pad, sh, sw)

    # ---- VMEM limit (per generation, no unconditional 64 MiB clamp) --------
    x_blk_b = int(np.prod(x_in.shape[1:])) * 2
    w_blk_b = wmat.shape[0] * wmat.shape[1] * TN * 2
    o_blk_b = TM * TN * 4
    vmem_est = 2 * (x_blk_b + w_blk_b + o_blk_b) + o_blk_b + (2 << 20)
    vmem_limit = int(min(max(vmem_est, 32 << 20), int(vmem_cap * 0.9)))

    cost = pl.CostEstimate(
        flops=2 * B * M_pad * (KH * KW * C) * O_pad,
        transcendentals=0,
        bytes_accessed=int(x_in.size * 2 + B * wmat.size * 2 + B * M_pad * O_pad * 4),
    )

    out = pl.pallas_call(
        kernel,
        out_shape=jax.ShapeDtypeStruct((B, M_pad, O_pad), jnp.float32),
        grid=(B, n_blk, n_m),
        in_specs=[
            # Whole padded image; block index depends only on b, so it stays
            # VMEM-resident across the inner (n, m) axes (one DMA per image).
            pl.BlockSpec((None, x_in.shape[1], x_in.shape[2], x_in.shape[3]),
                         lambda b, n, m: (b, 0, 0, 0)),
            # Weight slab for this output-channel block (constant across m).
            pl.BlockSpec((wmat.shape[0], wmat.shape[1], TN),
                         lambda b, n, m: (0, 0, n)),
        ],
        out_specs=pl.BlockSpec((None, TM, TN), lambda b, n, m: (b, m, n)),
        compiler_params=pltpu.CompilerParams(
            dimension_semantics=("parallel", "parallel", "parallel"),
            vmem_limit_bytes=vmem_limit,
        ),
        cost_estimate=cost,
    )(x_in, wmat)

    out = out.reshape(B, OH_pad, OW_pad, O_pad)[:, :OH, :OW, :O]
    # NHWC -> NCHW for PyTorch-compatible output (one HBM round trip).
    # TODO(synk): provide an f32-input path if bit-closer parity with
    # PyTorch's pure-f32 conv is ever required (bf16 MXU inputs here).
    return jnp.transpose(out, (0, 3, 1, 2))


class Conv2d:
    """JAX/Pallas replica of the PyTorch Conv2d module (bias=False)."""

    def __init__(self, in_channels, out_channels, kernel_size,
                 stride=1, padding=0, *, key):
        self.in_channels = in_channels
        self.out_channels = out_channels
        self.kernel_size = force_pair(kernel_size)
        self.stride = stride
        self.padding = padding
        scale = 1.0 / np.sqrt(in_channels * self.kernel_size[0] * self.kernel_size[1])
        # deterministic init mirroring (rand*2-1)*scale
        self.weight = (
            jax.random.uniform(
                key,
                (out_channels, in_channels, self.kernel_size[0], self.kernel_size[1]),
                dtype=jnp.float32,
            ) * 2.0 - 1.0
        ) * scale

    def __call__(self, x):
        return conv2d_pallas(x, self.weight, self.stride, self.padding)


# --------------------------------- main ----------------------------------- #
if __name__ == "__main__":
    key = jax.random.PRNGKey(0)
    k_x, k_w, k_x2 = jax.random.split(key, 3)

    B, C, H, W = 2, 4, 16, 16
    O, K = 8, 3
    x = jax.random.normal(k_x, (B, C, H, W), dtype=jnp.float32)

    conv = Conv2d(C, O, K, stride=1, padding=1, key=k_w)
    y = jax.block_until_ready(conv(x))

    y_ref = jax.lax.conv_general_dilated(
        x, conv.weight, window_strides=(1, 1), padding=((1, 1), (1, 1)),
        dimension_numbers=("NCHW", "OIHW", "NCHW"),
    )
    assert y.shape == (B, O, H, W), y.shape
    # bf16 matmul inputs with f32 accumulation -> loosened tolerance vs f32 ref.
    np.testing.assert_allclose(np.asarray(y), np.asarray(y_ref), atol=2e-2, rtol=2e-2)

    # Second config exercises the ragged paths (OW=11 -> padded to 16, OH=11 ->
    # two row tiles of 8, no padding).
    x2 = jax.random.normal(k_x2, (2, C, 13, 13), dtype=jnp.float32)
    y2 = jax.block_until_ready(conv2d_pallas(x2, conv.weight, 1, 0))
    y2_ref = jax.lax.conv_general_dilated(
        x2, conv.weight, window_strides=(1, 1), padding=((0, 0), (0, 0)),
        dimension_numbers=("NCHW", "OIHW", "NCHW"),
    )
    assert y2.shape == (2, O, 11, 11), y2.shape
    np.testing.assert_allclose(np.asarray(y2), np.asarray(y2_ref), atol=2e-2, rtol=2e-2)

    print("KERNEL_OK")
</pallas_src>

<mosaic_0001>
module attributes {stable_mosaic.version = 11 : i64} {
  func.func @kernel(%arg0: i32, %arg1: i32, %arg2: i32, %arg3: memref<1x18x16x12xbf16, #tpu.memory_space<vmem>>, %arg4: memref<3x12x128xbf16, #tpu.memory_space<vmem>>, %arg5: memref<1x256x128xf32, #tpu.memory_space<vmem>>) attributes {dimension_semantics = [#tpu.dimension_semantics<parallel>, #tpu.dimension_semantics<parallel>, #tpu.dimension_semantics<parallel>], iteration_bounds = array<i64: 2, 1, 1>, scalar_prefetch = 0 : i64, scratch_operands = 0 : i64, tpu.core_type = #tpu.core_type<tc>, window_params = [{transform_indices = @transform_0, window_bounds = array<i64: 1, 18, 16, 12>}, {transform_indices = @transform_1, window_bounds = array<i64: 3, 12, 128>}, {transform_indices = @transform_2, window_bounds = array<i64: 1, 256, 128>}]} {
    %c16_i32 = arith.constant 16 : i32
    %0 = arith.muli %arg2, %c16_i32 : i32
    %1 = tpu.assume_multiple %0, 8 : i32
    %c0_i32 = arith.constant 0 : i32
    %2 = arith.addi %1, %c0_i32 : i32
    %c0 = arith.constant 0 : index
    %3 = arith.index_cast %2 : i32 to index
    %c0_0 = arith.constant 0 : index
    %c0_1 = arith.constant 0 : index
    %4 = vector.load %arg3[%c0, %3, %c0_0, %c0_1] : memref<1x18x16x12xbf16, #tpu.memory_space<vmem>>, vector<1x16x16x12xbf16>
    %5 = vector.shape_cast %4 : vector<1x16x16x12xbf16> to vector<16x16x12xbf16>
    %6 = vector.shape_cast %5 : vector<16x16x12xbf16> to vector<256x12xbf16>
    %c0_2 = arith.constant 0 : index
    %c0_3 = arith.constant 0 : index
    %c0_4 = arith.constant 0 : index
    %7 = vector.load %arg4[%c0_2, %c0_3, %c0_4] : memref<3x12x128xbf16, #tpu.memory_space<vmem>>, vector<1x12x128xbf16>
    %8 = vector.shape_cast %7 : vector<1x12x128xbf16> to vector<12x128xbf16>
    %cst = arith.constant dense<0.000000e+00> : vector<256x128xf32>
    %9 = tpu.matmul %6, %8, %cst {dimension_numbers = #tpu.dot_dimension_numbers<[1], [0], [0], [1], [0, 0, 1, 1], [], []>} : vector<256x12xbf16>, vector<12x128xbf16>, vector<256x128xf32> -> vector<256x128xf32>
    %c1_i32 = arith.constant 1 : i32
    %10 = arith.addi %1, %c1_i32 : i32
    %c0_5 = arith.constant 0 : index
    %11 = arith.index_cast %10 : i32 to index
    %c0_6 = arith.constant 0 : index
    %c0_7 = arith.constant 0 : index
    %12 = vector.load %arg3[%c0_5, %11, %c0_6, %c0_7] : memref<1x18x16x12xbf16, #tpu.memory_space<vmem>>, vector<1x16x16x12xbf16>
    %13 = vector.shape_cast %12 : vector<1x16x16x12xbf16> to vector<16x16x12xbf16>
    %14 = vector.shape_cast %13 : vector<16x16x12xbf16> to vector<256x12xbf16>
    %c1 = arith.constant 1 : index
    %c0_8 = arith.constant 0 : index
    %c0_9 = arith.constant 0 : index
    %15 = vector.load %arg4[%c1, %c0_8, %c0_9] : memref<3x12x128xbf16, #tpu.memory_space<vmem>>, vector<1x12x128xbf16>
    %16 = vector.shape_cast %15 : vector<1x12x128xbf16> to vector<12x128xbf16>
    %cst_10 = arith.constant dense<0.000000e+00> : vector<256x128xf32>
    %17 = tpu.matmul %14, %16, %cst_10 {dimension_numbers = #tpu.dot_dimension_numbers<[1], [0], [0], [1], [0, 0, 1, 1], [], []>} : vector<256x12xbf16>, vector<12x128xbf16>, vector<256x128xf32> -> vector<256x128xf32>
    %18 = arith.addf %9, %17 : vector<256x128xf32>
    %c2_i32 = arith.constant 2 : i32
    %19 = arith.addi %1, %c2_i32 : i32
    %c0_11 = arith.constant 0 : index
    %20 = arith.index_cast %19 : i32 to index
    %c0_12 = arith.constant 0 : index
    %c0_13 = arith.constant 0 : index
    %21 = vector.load %arg3[%c0_11, %20, %c0_12, %c0_13] : memref<1x18x16x12xbf16, #tpu.memory_space<vmem>>, vector<1x16x16x12xbf16>
    %22 = vector.shape_cast %21 : vector<1x16x16x12xbf16> to vector<16x16x12xbf16>
    %23 = vector.shape_cast %22 : vector<16x16x12xbf16> to vector<256x12xbf16>
    %c2 = arith.constant 2 : index
    %c0_14 = arith.constant 0 : index
    %c0_15 = arith.constant 0 : index
    %24 = vector.load %arg4[%c2, %c0_14, %c0_15] : memref<3x12x128xbf16, #tpu.memory_space<vmem>>, vector<1x12x128xbf16>
    %25 = vector.shape_cast %24 : vector<1x12x128xbf16> to vector<12x128xbf16>
    %cst_16 = arith.constant dense<0.000000e+00> : vector<256x128xf32>
    %26 = tpu.matmul %23, %25, %cst_16 {dimension_numbers = #tpu.dot_dimension_numbers<[1], [0], [0], [1], [0, 0, 1, 1], [], []>} : vector<256x12xbf16>, vector<12x128xbf16>, vector<256x128xf32> -> vector<256x128xf32>
    %27 = arith.addf %18, %26 : vector<256x128xf32>
    %c0_17 = arith.constant 0 : index
    %c0_18 = arith.constant 0 : index
    %c0_19 = arith.constant 0 : index
    %28 = vector.load %arg5[%c0_17, %c0_18, %c0_19] : memref<1x256x128xf32, #tpu.memory_space<vmem>>, vector<1x256x128xf32>
    %29 = vector.shape_cast %28 : vector<1x256x128xf32> to vector<256x128xf32>
    %30 = vector.shape_cast %27 : vector<256x128xf32> to vector<1x256x128xf32>
    tpu.vector_store %arg5[%c0_17, %c0_18, %c0_19], %30 {strides = array<i32>} : memref<1x256x128xf32, #tpu.memory_space<vmem>>, vector<1x256x128xf32>,
    return
  }
  func.func @transform_0(%arg0: i32, %arg1: i32, %arg2: i32) -> (i32, i32, i32, i32) {
    %c0_i32 = arith.constant 0 : i32
    %c0_i32_0 = arith.constant 0 : i32
    %c0_i32_1 = arith.constant 0 : i32
    %c0_i32_2 = arith.constant 0 : i32
    return %arg0, %c0_i32, %c0_i32_0, %c0_i32_1 : i32, i32, i32, i32
  }
  func.func @transform_1(%arg0: i32, %arg1: i32, %arg2: i32) -> (i32, i32, i32) {
    %c0_i32 = arith.constant 0 : i32
    %c0_i32_0 = arith.constant 0 : i32
    %c0_i32_1 = arith.constant 0 : i32
    return %c0_i32, %c0_i32_0, %arg1 : i32, i32, i32
  }
  func.func @transform_2(%arg0: i32, %arg1: i32, %arg2: i32) -> (i32, i32, i32) {
    %c0_i32 = arith.constant 0 : i32
    return %arg0, %arg2, %arg1 : i32, i32, i32
  }
}

</mosaic_0001>

<llo_original>
// kernel: conv2d_pallas.1
$region0: #{conv2d_pallas.1}
  #allocation0 [shape = 'u32[]', space=smem, size = 0x4, offset = 0x4, fixed_abs, tag = 'smem constant byte address 0x4 - core index']
  #allocation1 [shape = 'u32[144,128]{1,0:T(1,128)}', space=vmem, size = 0x12000, scoped, tag = 'internal scratch']
  %s0 = inlined_call_operand.vmem [shape: bf16[2,18,16,12], index: 0, kind: input, shape index: {}]
  %s1 = inlined_call_operand.vmem [shape: bf16[3,12,128], index: 1, kind: input, shape index: {}]
  %s2 = inlined_call_operand.vmem [shape: f32[2,256,128], index: 2, kind: output, shape index: {}]
  %s3 = sld [smem:[#allocation0]]
  $region41: #{conv2d_pallas.1} parent=0
    _
  %s5 = ssub.s32 1, %s3
  %s6 = scalar_select 0, %s5, %s3
  loop: start=0, step=1, limit=4
  $region2: #{conv2d_pallas.1} parent=0 // loop_pre_header
    _
  $region3: #{conv2d_pallas.1} parent=0 // loop_header
    %s8 = sphi 0, %s12
    %p9 = scmp.ge.s32.totalorder %s8, 4
    %s15 = sphi 0, %s34
    %s16 = sphi 0, %s30
    %s17 = sphi 0, %s26
    %s18 = sphi 0, %s15
    %s19 = sphi 0, %s16
    %s20 = sphi 0, %s17
    %s21 = sphi 0, %s18
    %s22 = sphi 0, %s19
    %s23 = sphi 0, %s20
    %s37 = sphi 0, %s39
    %s40 = sphi 0, %s37
    %s41 = sphi 0, %s40
    %s57 = sphi 0, %s41
    %s63 = sphi 0, %s65
    %s66 = sphi 0, %s63
    %s67 = sphi 0, %s66
    %s83 = sphi 0, %s67
    %s93 = sphi 0, %s95
    %s96 = sphi 0, %s93
    %s97 = sphi 0, %s96
    %s113 = sphi 0, %s97
  $region4: #{conv2d_pallas.1} parent=0 // loop_header_branch
    %11 = sbr.rel (%p9) target = $region8
  $region5: #{conv2d_pallas.1} parent=0 // loop_body
    %s13 = ssub.s32 %s8, 1
    %s14 = ssub.s32 %s8, 2
    %s24 = sadd.s32 1, %s17
    %p25 = scmp.ge.s32.totalorder %s24, 1
    %s26 = scalar_select %p25, 0, %s24
    %s27 = sadd.s32 1, %s16
    %s28 = scalar_select %p25, %s27, %s16
    %p29 = scmp.ge.s32.totalorder %s28, 1
    %s30 = scalar_select %p29, 0, %s28
    %s31 = sadd.s32 1, %s15
    %s32 = scalar_select %p29, %s31, %s15
    %p33 = scmp.ge.s32.totalorder %s32, 2
    %s34 = scalar_select %p33, 0, %s32
    %s35 = ssub.s32 %s15, %s34
    %p36 = scmp.eq.s32.totalorder %s35, 0
    %s38 = sadd.s32 %s37, 1
    %s39 = scalar_select %p36, %s37, %s38
    %p42 = pneg %p36
    %p43 = scmp.eq.s32.totalorder %s8, 1
    %p44 = por %p42, %p43
    %p45 = scmp.ne.s32.totalorder %s37, %s40
    %p46 = scmp.eq.s32.totalorder %s8, 0
    %p47 = por %p45, %p46
    %p48 = scmp.ne.s32.totalorder %s37, %s40
    %p49 = scmp.eq.s32.totalorder %s13, 1
    %p50 = por %p48, %p49
    %p51 = scmp.ne.s32.totalorder %s40, %s41
    %p52 = scmp.eq.s32.totalorder %s13, 0
    %p53 = por %p51, %p52
    %p54 = scmp.ne.s32.totalorder %s40, %s41
    %p55 = scmp.eq.s32.totalorder %s14, 1
    %p56 = por %p54, %p55
    %p58 = scmp.ne.s32.totalorder %s41, %s57
    %p59 = scmp.eq.s32.totalorder %s14, 0
    %p60 = por %p58, %p59
    %s61 = ssub.s32 %s16, %s30
    %p62 = scmp.eq.s32.totalorder %s61, 0
    %s64 = sadd.s32 %s63, 1
    %s65 = scalar_select %p62, %s63, %s64
    %p68 = pneg %p62
    %p69 = scmp.eq.s32.totalorder %s8, 1
    %p70 = por %p68, %p69
    %p71 = scmp.ne.s32.totalorder %s63, %s66
    %p72 = scmp.eq.s32.totalorder %s8, 0
    %p73 = por %p71, %p72
    %p74 = scmp.ne.s32.totalorder %s63, %s66
    %p75 = scmp.eq.s32.totalorder %s13, 1
    %p76 = por %p74, %p75
    %p77 = scmp.ne.s32.totalorder %s66, %s67
    %p78 = scmp.eq.s32.totalorder %s13, 0
    %p79 = por %p77, %p78
    %p80 = scmp.ne.s32.totalorder %s66, %s67
    %p81 = scmp.eq.s32.totalorder %s14, 1
    %p82 = por %p80, %p81
    %p84 = scmp.ne.s32.totalorder %s67, %s83
    %p85 = scmp.eq.s32.totalorder %s14, 0
    %p86 = por %p84, %p85
    %s87 = ssub.s32 %s15, %s34
    %s88 = ssub.s32 %s17, %s26
    %s89 = sor.u32 %s87, %s88
    %s90 = ssub.s32 %s16, %s30
    %s91 = sor.u32 %s89, %s90
    %p92 = scmp.eq.s32.totalorder %s91, 0
    %s94 = sadd.s32 %s93, 1
    %s95 = scalar_select %p92, %s93, %s94
    %p98 = pneg %p92
    %p99 = scmp.eq.s32.totalorder %s8, 1
    %p100 = por %p98, %p99
    %p101 = scmp.ne.s32.totalorder %s93, %s96
    %p102 = scmp.eq.s32.totalorder %s8, 0
    %p103 = por %p101, %p102
    %p104 = scmp.ne.s32.totalorder %s93, %s96
    %p105 = scmp.eq.s32.totalorder %s13, 1
    %p106 = por %p104, %p105
    %p107 = scmp.ne.s32.totalorder %s96, %s97
    %p108 = scmp.eq.s32.totalorder %s13, 0
    %p109 = por %p107, %p108
    %p110 = scmp.ne.s32.totalorder %s96, %s97
    %p111 = scmp.eq.s32.totalorder %s14, 1
    %p112 = por %p110, %p111
    %p114 = scmp.ne.s32.totalorder %s97, %s113
    %p115 = scmp.eq.s32.totalorder %s14, 0
    %p116 = por %p114, %p115
    %p117 = scmp.le.s32.totalorder 1, %s8
    %p118 = scmp.lt.s32.totalorder %s8, 3
    %p119 = pnand %p117, %p118
    %p120 = pneg %p119
    // Predicated region
    $region9: #{conv2d_pallas.1} parent=5 // pred_check
      _
    $region10: #{conv2d_pallas.1} parent=5 // pred_check_branch
      %122 = sbr.rel (%p119) target = $region12
    $region11: #{conv2d_pallas.1} parent=5 // pred_region
      %s123 = ssub.s32 %s8, 1
      // Predicated region
      $region13: #{conv2d_pallas.1} parent=11 // pred_check
        %p124 = pneg %p79
      $region14: #{conv2d_pallas.1} parent=11 // pred_check_branch
        %126 = sbr.rel (%p124) target = $region16
      $region15: #{conv2d_pallas.1} parent=11 // pred_region
        %p127 = scmp.lt.s32.totalorder %s19, 0
        %s128 = scalar_select %p127, %s19, 0
        %s129 = smul.addr %s128, 4
        %s130 = scalar_lea.vmem %s1, %s129
      $region16: #{conv2d_pallas.1} parent=11 // pred_fallthru
        _
    $region12: #{conv2d_pallas.1} parent=5 // pred_fallthru
      _
    %p131 = scmp.lt.s32.totalorder %s8, 2
    // Predicated region
    $region17: #{conv2d_pallas.1} parent=5 // pred_check
      %p132 = pneg %p131
    $region18: #{conv2d_pallas.1} parent=5 // pred_check_branch
      %134 = sbr.rel (%p132) target = $region20
    $region19: #{conv2d_pallas.1} parent=5 // pred_region
      // Predicated region
      $region21: #{conv2d_pallas.1} parent=19 // pred_check
        %p135 = pneg %p47
      $region22: #{conv2d_pallas.1} parent=19 // pred_check_branch
        %137 = sbr.rel (%p135) target = $region24
      $region23: #{conv2d_pallas.1} parent=19 // pred_region
        %p138 = scmp.lt.s32.totalorder %s15, 1
        %s139 = scalar_select %p138, %s15, 1
        %s140 = smul.addr %s139, 36
        %s141 = smul.addr %s140, 4
        %s142 = scalar_lea.vmem %s0, %s141
      $region24: #{conv2d_pallas.1} parent=19 // pred_fallthru
        _
    $region20: #{conv2d_pallas.1} parent=5 // pred_fallthru
      _
    %p143 = scmp.le.s32.totalorder 1, %s8
    %p144 = scmp.lt.s32.totalorder %s8, 3
    %p145 = pnand %p143, %p144
    %p146 = pneg %p145
    // Predicated region
    $region25: #{conv2d_pallas.1} parent=5 // pred_check
      _
    $region26: #{conv2d_pallas.1} parent=5 // pred_check_branch
      %148 = sbr.rel (%p145) target = $region28
    $region27: #{conv2d_pallas.1} parent=5 // pred_region
      %s149 = ssub.s32 %s8, 1
      %p150 = scmp.lt.s32.totalorder %s18, 1
      %s151 = scalar_select %p150, %s18, 1
      %s152 = smul.addr %s151, 36
      %s153 = smul.addr %s152, 4
      %s154 = scalar_lea.vmem %s0, %s153
      %p155 = pneg %p53
      %p156 = pneg %p50
      %p157 = scmp.lt.s32.totalorder %s19, 0
      %s158 = scalar_select %p157, %s19, 0
      %s159 = smul.addr %s158, 4
      %s160 = scalar_lea.vmem %s1, %s159
      %p161 = pneg %p79
      %p162 = pneg %p76
      %p163 = pneg %p109
      %p164 = pneg %p106
      %s165 = smul.u32 32, %s20
      %p166 = scmp.lt.s32.totalorder %s18, 1
      %s167 = scalar_select %p166, %s18, 1
      %p168 = scmp.lt.s32.totalorder %s165, 31
      %s169 = scalar_select %p168, %s165, 31
      %p170 = scmp.lt.s32.totalorder %s19, 0
      %s171 = scalar_select %p170, %s19, 0
      %s172 = sadd.s32 %s171, %s169
      %s173 = smul.addr %s167, 32
      %s174 = sadd.s32 %s172, %s173
      %s175 = smul.addr %s174, 8
      %s176 = scalar_lea.vmem %s2, %s175
      %p177 = scmp.lt.s32.totalorder %s18, 1
      %s178 = scalar_select %p177, %s18, 1
      %s179 = smul.addr %s178, 36
      %s180 = smul.addr %s179, 4
      %s181 = scalar_lea.vmem %s0, %s180
      %p182 = scmp.lt.s32.totalorder %s19, 0
      %s183 = scalar_select %p182, %s19, 0
      %s184 = smul.addr %s183, 4
      %s185 = scalar_lea.vmem %s1, %s184
      %s186 = smul.u32 32, %s20
      %p187 = scmp.lt.s32.totalorder %s18, 1
      %s188 = scalar_select %p187, %s18, 1
      %p189 = scmp.lt.s32.totalorder %s186, 31
      %s190 = scalar_select %p189, %s186, 31
      %p191 = scmp.lt.s32.totalorder %s19, 0
      %s192 = scalar_select %p191, %s19, 0
      %s193 = sadd.s32 %s192, %s190
      %s194 = smul.addr %s188, 32
      %s195 = sadd.s32 %s193, %s194
      %s196 = smul.addr %s195, 8
      %s197 = scalar_lea.vmem %s2, %s196
      %s198 = smul.u32 32, %s20
      %s200 = smul.u32 %s20, 16
      %s201 = smul.u32 %s200, 2
      %s202 = smul.addr %s201, 4
      %s203 = scalar_lea.vmem %s181, %s202
      %v204 = vld [vmem:[%s203] sm:$0xf]
      %v205 = vld [vmem:[%s203 + $0x4] sm:$0xf]
      %v206 = vld [vmem:[%s203 + $0x8] sm:$0xf]
      %v207 = vld [vmem:[%s203 + $0xc] sm:$0xf]
      %v208 = vld [vmem:[%s203 + $0x10] sm:$0xf]
      %v209 = vld [vmem:[%s203 + $0x14] sm:$0xf]
      %v210 = vld [vmem:[%s203 + $0x18] sm:$0xf]
      %v211 = vld [vmem:[%s203 + $0x1c] sm:$0xf]
      %v212 = vld [vmem:[%s203 + $0x20] sm:$0xf]
      %v213 = vld [vmem:[%s203 + $0x24] sm:$0xf]
      %v214 = vld [vmem:[%s203 + $0x28] sm:$0xf]
      %v215 = vld [vmem:[%s203 + $0x2c] sm:$0xf]
      %v216 = vld [vmem:[%s203 + $0x30] sm:$0xf]
      %v217 = vld [vmem:[%s203 + $0x34] sm:$0xf]
      %v218 = vld [vmem:[%s203 + $0x38] sm:$0xf]
      %v219 = vld [vmem:[%s203 + $0x3c] sm:$0xf]
      %v220 = vld [vmem:[%s203 + $0x40] sm:$0xf]
      %v221 = vld [vmem:[%s203 + $0x44] sm:$0xf]
      %v222 = vld [vmem:[%s203 + $0x48] sm:$0xf]
      %v223 = vld [vmem:[%s203 + $0x4c] sm:$0xf]
      %v224 = vld [vmem:[%s203 + $0x50] sm:$0xf]
      %v225 = vld [vmem:[%s203 + $0x54] sm:$0xf]
      %v226 = vld [vmem:[%s203 + $0x58] sm:$0xf]
      %v227 = vld [vmem:[%s203 + $0x5c] sm:$0xf]
      %v228 = vld [vmem:[%s203 + $0x60] sm:$0xf]
      %v229 = vld [vmem:[%s203 + $0x64] sm:$0xf]
      %v230 = vld [vmem:[%s203 + $0x68] sm:$0xf]
      %v231 = vld [vmem:[%s203 + $0x6c] sm:$0xf]
      %v232 = vld [vmem:[%s203 + $0x70] sm:$0xf]
      %v233 = vld [vmem:[%s203 + $0x74] sm:$0xf]
      %v234 = vld [vmem:[%s203 + $0x78] sm:$0xf]
      %v235 = vld [vmem:[%s203 + $0x7c] sm:$0xf]
      %v236 = vld [vmem:[%s185] sm:$0xf]
      %v237 = vld [vmem:[%s185 + $0x4] sm:$0x3]
      %s238 = sadd.s32 %s200, 1
      %s239 = smul.u32 %s238, 2
      %s240 = smul.addr %s239, 4
      %s241 = scalar_lea.vmem %s181, %s240
      %v242 = vld [vmem:[%s241] sm:$0xf]
      %v243 = vld [vmem:[%s241 + $0x4] sm:$0xf]
      %v244 = vld [vmem:[%s241 + $0x8] sm:$0xf]
      %v245 = vld [vmem:[%s241 + $0xc] sm:$0xf]
      %v246 = vld [vmem:[%s241 + $0x10] sm:$0xf]
      %v247 = vld [vmem:[%s241 + $0x14] sm:$0xf]
      %v248 = vld [vmem:[%s241 + $0x18] sm:$0xf]
      %v249 = vld [vmem:[%s241 + $0x1c] sm:$0xf]
      %v250 = vld [vmem:[%s241 + $0x20] sm:$0xf]
      %v251 = vld [vmem:[%s241 + $0x24] sm:$0xf]
      %v252 = vld [vmem:[%s241 + $0x28] sm:$0xf]
      %v253 = vld [vmem:[%s241 + $0x2c] sm:$0xf]
      %v254 = vld [vmem:[%s241 + $0x30] sm:$0xf]
      %v255 = vld [vmem:[%s241 + $0x34] sm:$0xf]
      %v256 = vld [vmem:[%s241 + $0x38] sm:$0xf]
      %v257 = vld [vmem:[%s241 + $0x3c] sm:$0xf]
      %v258 = vld [vmem:[%s241 + $0x40] sm:$0xf]
      %v259 = vld [vmem:[%s241 + $0x44] sm:$0xf]
      %v260 = vld [vmem:[%s241 + $0x48] sm:$0xf]
      %v261 = vld [vmem:[%s241 + $0x4c] sm:$0xf]
      %v262 = vld [vmem:[%s241 + $0x50] sm:$0xf]
      %v263 = vld [vmem:[%s241 + $0x54] sm:$0xf]
      %v264 = vld [vmem:[%s241 + $0x58] sm:$0xf]
      %v265 = vld [vmem:[%s241 + $0x5c] sm:$0xf]
      %v266 = vld [vmem:[%s241 + $0x60] sm:$0xf]
      %v267 = vld [vmem:[%s241 + $0x64] sm:$0xf]
      %v268 = vld [vmem:[%s241 + $0x68] sm:$0xf]
      %v269 = vld [vmem:[%s241 + $0x6c] sm:$0xf]
      %v270 = vld [vmem:[%s241 + $0x70] sm:$0xf]
      %v271 = vld [vmem:[%s241 + $0x74] sm:$0xf]
      %v272 = vld [vmem:[%s241 + $0x78] sm:$0xf]
      %v273 = vld [vmem:[%s241 + $0x7c] sm:$0xf]
      %s274 = scalar_lea.vmem %s185, 8
      %v275 = vld [vmem:[%s274] sm:$0xf]
      %v276 = vld [vmem:[%s274 + $0x4] sm:$0x3]
      %v309 = vunpack.c.l.b16 %v242
      %v310 = vunpack.c.l.b16 %v243
      %v311 = vunpack.c.l.b16 %v244
      %v312 = vunpack.c.l.b16 %v245
      %v313 = vunpack.c.l.b16 %v246
      %v314 = vunpack.c.l.b16 %v247
      %v315 = vunpack.c.l.b16 %v248
      %v316 = vunpack.c.l.b16 %v249
      %v317 = vunpack.c.l.b16 %v250
      %v318 = vunpack.c.l.b16 %v251
      %v319 = vunpack.c.l.b16 %v252
      %v320 = vunpack.c.l.b16 %v253
      %v321 = vunpack.c.l.b16 %v254
      %v322 = vunpack.c.l.b16 %v255
      %v323 = vunpack.c.l.b16 %v256
      %v324 = vunpack.c.l.b16 %v257
      %v325 = vunpack.c.l.b16 %v258
      %v326 = vunpack.c.l.b16 %v259
      %v327 = vunpack.c.l.b16 %v260
      %v328 = vunpack.c.l.b16 %v261
      %v329 = vunpack.c.l.b16 %v262
      %v330 = vunpack.c.l.b16 %v263
      %v331 = vunpack.c.l.b16 %v264
      %v332 = vunpack.c.l.b16 %v265
      %v333 = vunpack.c.l.b16 %v266
      %v334 = vunpack.c.l.b16 %v267
      %v335 = vunpack.c.l.b16 %v268
      %v336 = vunpack.c.l.b16 %v269
      %v337 = vunpack.c.l.b16 %v270
      %v338 = vunpack.c.l.b16 %v271
      %v339 = vunpack.c.l.b16 %v272
      %v340 = vunpack.c.l.b16 %v273
      %v341 = vpack.c.b16 %v310, %v309
      %v342 = vpack.c.b16 %v312, %v311
      %v343 = vpack.c.b16 %v314, %v313
      %v344 = vpack.c.b16 %v316, %v315
      %v345 = vpack.c.b16 %v318, %v317
      %v346 = vpack.c.b16 %v320, %v319
      %v347 = vpack.c.b16 %v322, %v321
      %v348 = vpack.c.b16 %v324, %v323
      %v349 = vpack.c.b16 %v326, %v325
      %v350 = vpack.c.b16 %v328, %v327
      %v351 = vpack.c.b16 %v330, %v329
      %v352 = vpack.c.b16 %v332, %v331
      %v353 = vpack.c.b16 %v334, %v333
      %v354 = vpack.c.b16 %v336, %v335
      %v355 = vpack.c.b16 %v338, %v337
      %v356 = vpack.c.b16 %v340, %v339
      %v359 = vunpack.c.l.b16 %v275
      %v360 = vunpack.c.l.b16 %v276
      %v361 = vpack.c.b16 %v360, %v359
      %vm362 = vcmask 97280
      %v364 = vsel %vm362, %v341, 0
      %v367 = vsel %vm362, %v342, 0
      %v370 = vsel %vm362, %v343, 0
      %v373 = vsel %vm362, %v344, 0
      %v376 = vsel %vm362, %v345, 0
      %v379 = vsel %vm362, %v346, 0
      %v382 = vsel %vm362, %v347, 0
      %v385 = vsel %vm362, %v348, 0
      %v388 = vsel %vm362, %v349, 0
      %v391 = vsel %vm362, %v350, 0
      %v394 = vsel %vm362, %v351, 0
      %v397 = vsel %vm362, %v352, 0
      %v400 = vsel %vm362, %v353, 0
      %v403 = vsel %vm362, %v354, 0
      %v406 = vsel %vm362, %v355, 0
      %v409 = vsel %vm362, %v356, 0
      %vm411 = vcmask 1045504
      %v413 = vsel %vm411, %v361, 0
      %415 = vmatprep.subr.bf16.mxu0 0
      %416 = vmatpush1.bf16.msra.mxu0 %v413
      %417 = vmatprep.subr.bf16.mxu0 0
      %418 = vmatpush1.bf16.msra.mxu0 0
      %419 = vmatprep.subr.bf16.mxu0 0
      %420 = vmatpush1.bf16.msra.mxu0 0
      %421 = vmatprep.subr.bf16.mxu0 0
      %422 = vmatpush1.bf16.msra.mxu0 0
      %423 = vmatprep.subr.bf16.mxu0 0
      %424 = vmatpush1.bf16.msra.mxu0 0
      %425 = vmatprep.subr.bf16.mxu0 0
      %426 = vmatpush1.bf16.msra.mxu0 0
      %427 = vmatprep.subr.bf16.mxu0 0
      %428 = vmatpush1.bf16.msra.mxu0 0
      %429 = vmatprep.subr.bf16.mxu0 0
      %430 = vmatpush1.bf16.msra.mxu0 0
      %431 = vmatprep.subr.bf16.mxu0 0
      %432 = vmatpush1.bf16.msra.mxu0 0
      %433 = vmatprep.subr.bf16.mxu0 0
      %434 = vmatpush1.bf16.msra.mxu0 0
      %435 = vmatprep.subr.bf16.mxu0 0
      %436 = vmatpush1.bf16.msra.mxu0 0
      %437 = vmatprep.subr.bf16.mxu0 0
      %438 = vmatpush1.bf16.msra.mxu0 0
      %439 = vmatprep.subr.bf16.mxu0 0
      %440 = vmatpush1.bf16.msra.mxu0 0
      %441 = vmatprep.subr.bf16.mxu0 0
      %442 = vmatpush1.bf16.msra.mxu0 0
      %443 = vmatprep.subr.bf16.mxu0 0
      %444 = vmatpush1.bf16.msra.mxu0 0
      %445 = vmatprep.subr.bf16.mxu0 0
      %446 = vmatpush1.bf16.msra.mxu0 0
      %447 = vmatprep.mubr.bf16.mxu0 0
      %448 = vmatmul.mubr.bf16.gmra.mrb[0].mxu0 %v364
      %v449 = vpop.f32.mrb[0].mxu0
      %v450 = vadd.f32 0.0, %v449
      %v451 = vpop.f32.mrb[0].mxu0
      %v452 = vpop.f32.mrb[0].mxu0
      %v453 = vadd.f32 0.0, %v452
      %v454 = vpop.f32.mrb[0].mxu0
      %455 = vmatprep.mubr.bf16.mxu0 0
      %456 = vmatmul.mubr.bf16.gmra.mrb[0].mxu0 %v367
      %v457 = vpop.f32.mrb[0].mxu0
      %v458 = vadd.f32 0.0, %v457
      %v459 = vpop.f32.mrb[0].mxu0
      %v460 = vpop.f32.mrb[0].mxu0
      %v461 = vadd.f32 0.0, %v460
      %v462 = vpop.f32.mrb[0].mxu0
      %463 = vmatprep.mubr.bf16.mxu0 0
      %464 = vmatmul.mubr.bf16.gmra.mrb[0].mxu0 %v370
      %v465 = vpop.f32.mrb[0].mxu0
      %v466 = vadd.f32 0.0, %v465
      %v467 = vpop.f32.mrb[0].mxu0
      %v468 = vpop.f32.mrb[0].mxu0
      %v469 = vadd.f32 0.0, %v468
      %v470 = vpop.f32.mrb[0].mxu0
      %471 = vmatprep.mubr.bf16.mxu0 0
      %472 = vmatmul.mubr.bf16.gmra.mrb[0].mxu0 %v373
      %v473 = vpop.f32.mrb[0].mxu0
      %v474 = vadd.f32 0.0, %v473
      %v475 = vpop.f32.mrb[0].mxu0
      %v476 = vpop.f32.mrb[0].mxu0
      %v477 = vadd.f32 0.0, %v476
      %v478 = vpop.f32.mrb[0].mxu0
      %479 = vmatprep.mubr.bf16.mxu0 0
      %480 = vmatmul.mubr.bf16.gmra.mrb[0].mxu0 %v376
      %v481 = vpop.f32.mrb[0].mxu0
      %v482 = vadd.f32 0.0, %v481
      %v483 = vpop.f32.mrb[0].mxu0
      %v484 = vpop.f32.mrb[0].mxu0
      %v485 = vadd.f32 0.0, %v484
      %v486 = vpop.f32.mrb[0].mxu0
      %487 = vmatprep.mubr.bf16.mxu0 0
      %488 = vmatmul.mubr.bf16.gmra.mrb[0].mxu0 %v379
      %v489 = vpop.f32.mrb[0].mxu0
      %v490 = vadd.f32 0.0, %v489
      %v491 = vpop.f32.mrb[0].mxu0
      %v492 = vpop.f32.mrb[0].mxu0
      %v493 = vadd.f32 0.0, %v492
      %v494 = vpop.f32.mrb[0].mxu0
      %495 = vmatprep.mubr.bf16.mxu0 0
      %496 = vmatmul.mubr.bf16.gmra.mrb[0].mxu0 %v382
      %v497 = vpop.f32.mrb[0].mxu0
      %v498 = vadd.f32 0.0, %v497
      %v499 = vpop.f32.mrb[0].mxu0
      %v500 = vpop.f32.mrb[0].mxu0
      %v501 = vadd.f32 0.0, %v500
      %v502 = vpop.f32.mrb[0].mxu0
      %503 = vmatprep.mubr.bf16.mxu0 0
      %504 = vmatmul.mubr.bf16.gmra.mrb[0].mxu0 %v385
      %v505 = vpop.f32.mrb[0].mxu0
      %v506 = vadd.f32 0.0, %v505
      %v507 = vpop.f32.mrb[0].mxu0
      %v508 = vpop.f32.mrb[0].mxu0
      %v509 = vadd.f32 0.0, %v508
      %v510 = vpop.f32.mrb[0].mxu0
      %511 = vmatprep.mubr.bf16.mxu0 0
      %512 = vmatmul.mubr.bf16.gmra.mrb[0].mxu0 %v388
      %v513 = vpop.f32.mrb[0].mxu0
      %v514 = vadd.f32 0.0, %v513
      %v515 = vpop.f32.mrb[0].mxu0
      %v516 = vpop.f32.mrb[0].mxu0
      %v517 = vadd.f32 0.0, %v516
      %v518 = vpop.f32.mrb[0].mxu0
      %519 = vmatprep.mubr.bf16.mxu0 0
      %520 = vmatmul.mubr.bf16.gmra.mrb[0].mxu0 %v391
      %v521 = vpop.f32.mrb[0].mxu0
      %v522 = vadd.f32 0.0, %v521
      %v523 = vpop.f32.mrb[0].mxu0
      %v524 = vpop.f32.mrb[0].mxu0
      %v525 = vadd.f32 0.0, %v524
      %v526 = vpop.f32.mrb[0].mxu0
      %527 = vmatprep.mubr.bf16.mxu0 0
      %528 = vmatmul.mubr.bf16.gmra.mrb[0].mxu0 %v394
      %v529 = vpop.f32.mrb[0].mxu0
      %v530 = vadd.f32 0.0, %v529
      %v531 = vpop.f32.mrb[0].mxu0
      %v532 = vpop.f32.mrb[0].mxu0
      %v533 = vadd.f32 0.0, %v532
      %v534 = vpop.f32.mrb[0].mxu0
      %535 = vmatprep.mubr.bf16.mxu0 0
      %536 = vmatmul.mubr.bf16.gmra.mrb[0].mxu0 %v397
      %v537 = vpop.f32.mrb[0].mxu0
      %v538 = vadd.f32 0.0, %v537
      %v539 = vpop.f32.mrb[0].mxu0
      %v540 = vpop.f32.mrb[0].mxu0
      %v541 = vadd.f32 0.0, %v540
      %v542 = vpop.f32.mrb[0].mxu0
      %543 = vmatprep.mubr.bf16.mxu0 0
      %544 = vmatmul.mubr.bf16.gmra.mrb[0].mxu0 %v400
      %v545 = vpop.f32.mrb[0].mxu0
      %v546 = vadd.f32 0.0, %v545
      %v547 = vpop.f32.mrb[0].mxu0
      %v548 = vpop.f32.mrb[0].mxu0
      %v549 = vadd.f32 0.0, %v548
      %v550 = vpop.f32.mrb[0].mxu0
      %551 = vmatprep.mubr.bf16.mxu0 0
      %552 = vmatmul.mubr.bf16.gmra.mrb[0].mxu0 %v403
      %v553 = vpop.f32.mrb[0].mxu0
      %v554 = vadd.f32 0.0, %v553
      %v555 = vpop.f32.mrb[0].mxu0
      %v556 = vpop.f32.mrb[0].mxu0
      %v557 = vadd.f32 0.0, %v556
      %v558 = vpop.f32.mrb[0].mxu0
      %559 = vmatprep.mubr.bf16.mxu0 0
      %560 = vmatmul.mubr.bf16.gmra.mrb[0].mxu0 %v406
      %v561 = vpop.f32.mrb[0].mxu0
      %v562 = vadd.f32 0.0, %v561
      %v563 = vpop.f32.mrb[0].mxu0
      %v564 = vpop.f32.mrb[0].mxu0
      %v565 = vadd.f32 0.0, %v564
      %v566 = vpop.f32.mrb[0].mxu0
      %567 = vmatprep.mubr.bf16.mxu0 0
      %568 = vmatmul.mubr.bf16.gmra.mrb[0].mxu0 %v409
      %v569 = vpop.f32.mrb[0].mxu0
      %v570 = vadd.f32 0.0, %v569
      %v571 = vpop.f32.mrb[0].mxu0
      %v572 = vpop.f32.mrb[0].mxu0
      %v573 = vadd.f32 0.0, %v572
      %v574 = vpop.f32.mrb[0].mxu0
      %575 = vdwg.mxu0
      %v608 = vunpack.c.l.b16 %v204
      %v609 = vunpack.c.l.b16 %v205
      %v610 = vunpack.c.l.b16 %v206
      %v611 = vunpack.c.l.b16 %v207
      %v612 = vunpack.c.l.b16 %v208
      %v613 = vunpack.c.l.b16 %v209
      %v614 = vunpack.c.l.b16 %v210
      %v615 = vunpack.c.l.b16 %v211
      %v616 = vunpack.c.l.b16 %v212
      %v617 = vunpack.c.l.b16 %v213
      %v618 = vunpack.c.l.b16 %v214
      %v619 = vunpack.c.l.b16 %v215
      %v620 = vunpack.c.l.b16 %v216
      %v621 = vunpack.c.l.b16 %v217
      %v622 = vunpack.c.l.b16 %v218
      %v623 = vunpack.c.l.b16 %v219
      %v624 = vunpack.c.l.b16 %v220
      %v625 = vunpack.c.l.b16 %v221
      %v626 = vunpack.c.l.b16 %v222
      %v627 = vunpack.c.l.b16 %v223
      %v628 = vunpack.c.l.b16 %v224
      %v629 = vunpack.c.l.b16 %v225
      %v630 = vunpack.c.l.b16 %v226
      %v631 = vunpack.c.l.b16 %v227
      %v632 = vunpack.c.l.b16 %v228
      %v633 = vunpack.c.l.b16 %v229
      %v634 = vunpack.c.l.b16 %v230
      %v635 = vunpack.c.l.b16 %v231
      %v636 = vunpack.c.l.b16 %v232
      %v637 = vunpack.c.l.b16 %v233
      %v638 = vunpack.c.l.b16 %v234
      %v639 = vunpack.c.l.b16 %v235
      %v640 = vpack.c.b16 %v609, %v608
      %v641 = vpack.c.b16 %v611, %v610
      %v642 = vpack.c.b16 %v613, %v612
      %v643 = vpack.c.b16 %v615, %v614
      %v644 = vpack.c.b16 %v617, %v616
      %v645 = vpack.c.b16 %v619, %v618
      %v646 = vpack.c.b16 %v621, %v620
      %v647 = vpack.c.b16 %v623, %v622
      %v648 = vpack.c.b16 %v625, %v624
      %v649 = vpack.c.b16 %v627, %v626
      %v650 = vpack.c.b16 %v629, %v628
      %v651 = vpack.c.b16 %v631, %v630
      %v652 = vpack.c.b16 %v633, %v632
      %v653 = vpack.c.b16 %v635, %v634
      %v654 = vpack.c.b16 %v637, %v636
      %v655 = vpack.c.b16 %v639, %v638
      %v658 = vunpack.c.l.b16 %v236
      %v659 = vunpack.c.l.b16 %v237
      %v660 = vpack.c.b16 %v659, %v658
      %v662 = vsel %vm362, %v640, 0
      %v665 = vsel %vm362, %v641, 0
      %v668 = vsel %vm362, %v642, 0
      %v671 = vsel %vm362, %v643, 0
      %v674 = vsel %vm362, %v644, 0
      %v677 = vsel %vm362, %v645, 0
      %v680 = vsel %vm362, %v646, 0
      %v683 = vsel %vm362, %v647, 0
      %v686 = vsel %vm362, %v648, 0
      %v689 = vsel %vm362, %v649, 0
      %v692 = vsel %vm362, %v650, 0
      %v695 = vsel %vm362, %v651, 0
      %v698 = vsel %vm362, %v652, 0
      %v701 = vsel %vm362, %v653, 0
      %v704 = vsel %vm362, %v654, 0
      %v707 = vsel %vm362, %v655, 0
      %v710 = vsel %vm411, %v660, 0
      %712 = vmatprep.subr.bf16.mxu0 0
      %713 = vmatpush1.bf16.msra.mxu0 %v710
      %714 = vmatprep.subr.bf16.mxu0 0
      %715 = vmatpush1.bf16.msra.mxu0 0
      %716 = vmatprep.subr.bf16.mxu0 0
      %717 = vmatpush1.bf16.msra.mxu0 0
      %718 = vmatprep.subr.bf16.mxu0 0
      %719 = vmatpush1.bf16.msra.mxu0 0
      %720 = vmatprep.subr.bf16.mxu0 0
      %721 = vmatpush1.bf16.msra.mxu0 0
      %722 = vmatprep.subr.bf16.mxu0 0
      %723 = vmatpush1.bf16.msra.mxu0 0
      %724 = vmatprep.subr.bf16.mxu0 0
      %725 = vmatpush1.bf16.msra.mxu0 0
      %726 = vmatprep.subr.bf16.mxu0 0
      %727 = vmatpush1.bf16.msra.mxu0 0
      %728 = vmatprep.subr.bf16.mxu0 0
      %729 = vmatpush1.bf16.msra.mxu0 0
      %730 = vmatprep.subr.bf16.mxu0 0
      %731 = vmatpush1.bf16.msra.mxu0 0
      %732 = vmatprep.subr.bf16.mxu0 0
      %733 = vmatpush1.bf16.msra.mxu0 0
      %734 = vmatprep.subr.bf16.mxu0 0
      %735 = vmatpush1.bf16.msra.mxu0 0
      %736 = vmatprep.subr.bf16.mxu0 0
      %737 = vmatpush1.bf16.msra.mxu0 0
      %738 = vmatprep.subr.bf16.mxu0 0
      %739 = vmatpush1.bf16.msra.mxu0 0
      %740 = vmatprep.subr.bf16.mxu0 0
      %741 = vmatpush1.bf16.msra.mxu0 0
      %742 = vmatprep.subr.bf16.mxu0 0
      %743 = vmatpush1.bf16.msra.mxu0 0
      %744 = vmatprep.mubr.bf16.mxu0 0
      %745 = vmatmul.mubr.bf16.gmra.mrb[0].mxu0 %v662
      %v746 = vpop.f32.mrb[0].mxu0
      %v747 = vadd.f32 %v450, %v746
      %v748 = vpop.f32.mrb[0].mxu0
      %v749 = vpop.f32.mrb[0].mxu0
      %v750 = vadd.f32 %v453, %v749
      %v751 = vpop.f32.mrb[0].mxu0
      %752 = vmatprep.mubr.bf16.mxu0 0
      %753 = vmatmul.mubr.bf16.gmra.mrb[0].mxu0 %v665
      %v754 = vpop.f32.mrb[0].mxu0
      %v755 = vadd.f32 %v458, %v754
      %v756 = vpop.f32.mrb[0].mxu0
      %v757 = vpop.f32.mrb[0].mxu0
      %v758 = vadd.f32 %v461, %v757
      %v759 = vpop.f32.mrb[0].mxu0
      %760 = vmatprep.mubr.bf16.mxu0 0
      %761 = vmatmul.mubr.bf16.gmra.mrb[0].mxu0 %v668
      %v762 = vpop.f32.mrb[0].mxu0
      %v763 = vadd.f32 %v466, %v762
      %v764 = vpop.f32.mrb[0].mxu0
      %v765 = vpop.f32.mrb[0].mxu0
      %v766 = vadd.f32 %v469, %v765
      %v767 = vpop.f32.mrb[0].mxu0
      %768 = vmatprep.mubr.bf16.mxu0 0
      %769 = vmatmul.mubr.bf16.gmra.mrb[0].mxu0 %v671
      %v770 = vpop.f32.mrb[0].mxu0
      %v771 = vadd.f32 %v474, %v770
      %v772 = vpop.f32.mrb[0].mxu0
      %v773 = vpop.f32.mrb[0].mxu0
      %v774 = vadd.f32 %v477, %v773
      %v775 = vpop.f32.mrb[0].mxu0
      %776 = vmatprep.mubr.bf16.mxu0 0
      %777 = vmatmul.mubr.bf16.gmra.mrb[0].mxu0 %v674
      %v778 = vpop.f32.mrb[0].mxu0
      %v779 = vadd.f32 %v482, %v778
      %v780 = vpop.f32.mrb[0].mxu0
      %v781 = vpop.f32.mrb[0].mxu0
      %v782 = vadd.f32 %v485, %v781
      %v783 = vpop.f32.mrb[0].mxu0
      %784 = vmatprep.mubr.bf16.mxu0 0
      %785 = vmatmul.mubr.bf16.gmra.mrb[0].mxu0 %v677
      %v786 = vpop.f32.mrb[0].mxu0
      %v787 = vadd.f32 %v490, %v786
      %v788 = vpop.f32.mrb[0].mxu0
      %v789 = vpop.f32.mrb[0].mxu0
      %v790 = vadd.f32 %v493, %v789
      %v791 = vpop.f32.mrb[0].mxu0
      %792 = vmatprep.mubr.bf16.mxu0 0
      %793 = vmatmul.mubr.bf16.gmra.mrb[0].mxu0 %v680
      %v794 = vpop.f32.mrb[0].mxu0
      %v795 = vadd.f32 %v498, %v794
      %v796 = vpop.f32.mrb[0].mxu0
      %v797 = vpop.f32.mrb[0].mxu0
      %v798 = vadd.f32 %v501, %v797
      %v799 = vpop.f32.mrb[0].mxu0
      %800 = vmatprep.mubr.bf16.mxu0 0
      %801 = vmatmul.mubr.bf16.gmra.mrb[0].mxu0 %v683
      %v802 = vpop.f32.mrb[0].mxu0
      %v803 = vadd.f32 %v506, %v802
      %v804 = vpop.f32.mrb[0].mxu0
      %v805 = vpop.f32.mrb[0].mxu0
      %v806 = vadd.f32 %v509, %v805
      %v807 = vpop.f32.mrb[0].mxu0
      %808 = vmatprep.mubr.bf16.mxu0 0
      %809 = vmatmul.mubr.bf16.gmra.mrb[0].mxu0 %v686
      %v810 = vpop.f32.mrb[0].mxu0
      %v811 = vadd.f32 %v514, %v810
      %v812 = vpop.f32.mrb[0].mxu0
      %v813 = vpop.f32.mrb[0].mxu0
      %v814 = vadd.f32 %v517, %v813
      %v815 = vpop.f32.mrb[0].mxu0
      %816 = vmatprep.mubr.bf16.mxu0 0
      %817 = vmatmul.mubr.bf16.gmra.mrb[0].mxu0 %v689
      %v818 = vpop.f32.mrb[0].mxu0
      %v819 = vadd.f32 %v522, %v818
      %v820 = vpop.f32.mrb[0].mxu0
      %v821 = vpop.f32.mrb[0].mxu0
      %v822 = vadd.f32 %v525, %v821
      %v823 = vpop.f32.mrb[0].mxu0
      %824 = vmatprep.mubr.bf16.mxu0 0
      %825 = vmatmul.mubr.bf16.gmra.mrb[0].mxu0 %v692
      %v826 = vpop.f32.mrb[0].mxu0
      %v827 = vadd.f32 %v530, %v826
      %v828 = vpop.f32.mrb[0].mxu0
      %v829 = vpop.f32.mrb[0].mxu0
      %v830 = vadd.f32 %v533, %v829
      %v831 = vpop.f32.mrb[0].mxu0
      %832 = vmatprep.mubr.bf16.mxu0 0
      %833 = vmatmul.mubr.bf16.gmra.mrb[0].mxu0 %v695
      %v834 = vpop.f32.mrb[0].mxu0
      %v835 = vadd.f32 %v538, %v834
      %v836 = vpop.f32.mrb[0].mxu0
      %v837 = vpop.f32.mrb[0].mxu0
      %v838 = vadd.f32 %v541, %v837
      %v839 = vpop.f32.mrb[0].mxu0
      %840 = vmatprep.mubr.bf16.mxu0 0
      %841 = vmatmul.mubr.bf16.gmra.mrb[0].mxu0 %v698
      %v842 = vpop.f32.mrb[0].mxu0
      %v843 = vadd.f32 %v546, %v842
      %v844 = vpop.f32.mrb[0].mxu0
      %v845 = vpop.f32.mrb[0].mxu0
      %v846 = vadd.f32 %v549, %v845
      %v847 = vpop.f32.mrb[0].mxu0
      %848 = vmatprep.mubr.bf16.mxu0 0
      %849 = vmatmul.mubr.bf16.gmra.mrb[0].mxu0 %v701
      %v850 = vpop.f32.mrb[0].mxu0
      %v851 = vadd.f32 %v554, %v850
      %v852 = vpop.f32.mrb[0].mxu0
      %v853 = vpop.f32.mrb[0].mxu0
      %v854 = vadd.f32 %v557, %v853
      %v855 = vpop.f32.mrb[0].mxu0
      %856 = vmatprep.mubr.bf16.mxu0 0
      %857 = vmatmul.mubr.bf16.gmra.mrb[0].mxu0 %v704
      %v858 = vpop.f32.mrb[0].mxu0
      %v859 = vadd.f32 %v562, %v858
      %v860 = vpop.f32.mrb[0].mxu0
      %v861 = vpop.f32.mrb[0].mxu0
      %v862 = vadd.f32 %v565, %v861
      %v863 = vpop.f32.mrb[0].mxu0
      %864 = vmatprep.mubr.bf16.mxu0 0
      %865 = vmatmul.mubr.bf16.gmra.mrb[0].mxu0 %v707
      %v866 = vpop.f32.mrb[0].mxu0
      %v867 = vadd.f32 %v570, %v866
      %v868 = vpop.f32.mrb[0].mxu0
      %v869 = vpop.f32.mrb[0].mxu0
      %v870 = vadd.f32 %v573, %v869
      %v871 = vpop.f32.mrb[0].mxu0
      %872 = vdwg.mxu0
      %s873 = sadd.s32 %s200, 2
      %s874 = smul.u32 %s873, 2
      %s875 = smul.addr %s874, 4
      %s876 = scalar_lea.vmem %s181, %s875
      %v877 = vld [vmem:[%s876] sm:$0xf]
      %v878 = vld [vmem:[%s876 + $0x4] sm:$0xf]
      %v879 = vld [vmem:[%s876 + $0x8] sm:$0xf]
      %v880 = vld [vmem:[%s876 + $0xc] sm:$0xf]
      %v881 = vld [vmem:[%s876 + $0x10] sm:$0xf]
      %v882 = vld [vmem:[%s876 + $0x14] sm:$0xf]
      %v883 = vld [vmem:[%s876 + $0x18] sm:$0xf]
      %v884 = vld [vmem:[%s876 + $0x1c] sm:$0xf]
      %v885 = vld [vmem:[%s876 + $0x20] sm:$0xf]
      %v886 = vld [vmem:[%s876 + $0x24] sm:$0xf]
      %v887 = vld [vmem:[%s876 + $0x28] sm:$0xf]
      %v888 = vld [vmem:[%s876 + $0x2c] sm:$0xf]
      %v889 = vld [vmem:[%s876 + $0x30] sm:$0xf]
      %v890 = vld [vmem:[%s876 + $0x34] sm:$0xf]
      %v891 = vld [vmem:[%s876 + $0x38] sm:$0xf]
      %v892 = vld [vmem:[%s876 + $0x3c] sm:$0xf]
      %v893 = vld [vmem:[%s876 + $0x40] sm:$0xf]
      %v894 = vld [vmem:[%s876 + $0x44] sm:$0xf]
      %v895 = vld [vmem:[%s876 + $0x48] sm:$0xf]
      %v896 = vld [vmem:[%s876 + $0x4c] sm:$0xf]
      %v897 = vld [vmem:[%s876 + $0x50] sm:$0xf]
      %v898 = vld [vmem:[%s876 + $0x54] sm:$0xf]
      %v899 = vld [vmem:[%s876 + $0x58] sm:$0xf]
      %v900 = vld [vmem:[%s876 + $0x5c] sm:$0xf]
      %v901 = vld [vmem:[%s876 + $0x60] sm:$0xf]
      %v902 = vld [vmem:[%s876 + $0x64] sm:$0xf]
      %v903 = vld [vmem:[%s876 + $0x68] sm:$0xf]
      %v904 = vld [vmem:[%s876 + $0x6c] sm:$0xf]
      %v905 = vld [vmem:[%s876 + $0x70] sm:$0xf]
      %v906 = vld [vmem:[%s876 + $0x74] sm:$0xf]
      %v907 = vld [vmem:[%s876 + $0x78] sm:$0xf]
      %v908 = vld [vmem:[%s876 + $0x7c] sm:$0xf]
      %s909 = scalar_lea.vmem %s185, 16
      %v910 = vld [vmem:[%s909] sm:$0xf]
      %v911 = vld [vmem:[%s909 + $0x4] sm:$0x3]
      %v944 = vunpack.c.l.b16 %v877
      %v945 = vunpack.c.l.b16 %v878
      %v946 = vunpack.c.l.b16 %v879
      %v947 = vunpack.c.l.b16 %v880
      %v948 = vunpack.c.l.b16 %v881
      %v949 = vunpack.c.l.b16 %v882
      %v950 = vunpack.c.l.b16 %v883
      %v951 = vunpack.c.l.b16 %v884
      %v952 = vunpack.c.l.b16 %v885
      %v953 = vunpack.c.l.b16 %v886
      %v954 = vunpack.c.l.b16 %v887
      %v955 = vunpack.c.l.b16 %v888
      %v956 = vunpack.c.l.b16 %v889
      %v957 = vunpack.c.l.b16 %v890
      %v958 = vunpack.c.l.b16 %v891
      %v959 = vunpack.c.l.b16 %v892
      %v960 = vunpack.c.l.b16 %v893
      %v961 = vunpack.c.l.b16 %v894
      %v962 = vunpack.c.l.b16 %v895
      %v963 = vunpack.c.l.b16 %v896
      %v964 = vunpack.c.l.b16 %v897
      %v965 = vunpack.c.l.b16 %v898
      %v966 = vunpack.c.l.b16 %v899
      %v967 = vunpack.c.l.b16 %v900
      %v968 = vunpack.c.l.b16 %v901
      %v969 = vunpack.c.l.b16 %v902
      %v970 = vunpack.c.l.b16 %v903
      %v971 = vunpack.c.l.b16 %v904
      %v972 = vunpack.c.l.b16 %v905
      %v973 = vunpack.c.l.b16 %v906
      %v974 = vunpack.c.l.b16 %v907
      %v975 = vunpack.c.l.b16 %v908
      %v976 = vpack.c.b16 %v945, %v944
      %v977 = vpack.c.b16 %v947, %v946
      %v978 = vpack.c.b16 %v949, %v948
      %v979 = vpack.c.b16 %v951, %v950
      %v980 = vpack.c.b16 %v953, %v952
      %v981 = vpack.c.b16 %v955, %v954
      %v982 = vpack.c.b16 %v957, %v956
      %v983 = vpack.c.b16 %v959, %v958
      %v984 = vpack.c.b16 %v961, %v960
      %v985 = vpack.c.b16 %v963, %v962
      %v986 = vpack.c.b16 %v965, %v964
      %v987 = vpack.c.b16 %v967, %v966
      %v988 = vpack.c.b16 %v969, %v968
      %v989 = vpack.c.b16 %v971, %v970
      %v990 = vpack.c.b16 %v973, %v972
      %v991 = vpack.c.b16 %v975, %v974
      %v994 = vunpack.c.l.b16 %v910
      %v995 = vunpack.c.l.b16 %v911
      %v996 = vpack.c.b16 %v995, %v994
      %v998 = vsel %vm362, %v976, 0
      %v1001 = vsel %vm362, %v977, 0
      %v1004 = vsel %vm362, %v978, 0
      %v1007 = vsel %vm362, %v979, 0
      %v1010 = vsel %vm362, %v980, 0
      %v1013 = vsel %vm362, %v981, 0
      %v1016 = vsel %vm362, %v982, 0
      %v1019 = vsel %vm362, %v983, 0
      %v1022 = vsel %vm362, %v984, 0
      %v1025 = vsel %vm362, %v985, 0
      %v1028 = vsel %vm362, %v986, 0
      %v1031 = vsel %vm362, %v987, 0
      %v1034 = vsel %vm362, %v988, 0
      %v1037 = vsel %vm362, %v989, 0
      %v1040 = vsel %vm362, %v990, 0
      %v1043 = vsel %vm362, %v991, 0
      %v1046 = vsel %vm411, %v996, 0
      %1048 = vmatprep.subr.bf16.mxu0 0
      %1049 = vmatpush1.bf16.msra.mxu0 %v1046
      %1050 = vmatprep.subr.bf16.mxu0 0
      %1051 = vmatpush1.bf16.msra.mxu0 0
      %1052 = vmatprep.subr.bf16.mxu0 0
      %1053 = vmatpush1.bf16.msra.mxu0 0
      %1054 = vmatprep.subr.bf16.mxu0 0
      %1055 = vmatpush1.bf16.msra.mxu0 0
      %1056 = vmatprep.subr.bf16.mxu0 0
      %1057 = vmatpush1.bf16.msra.mxu0 0
      %1058 = vmatprep.subr.bf16.mxu0 0
      %1059 = vmatpush1.bf16.msra.mxu0 0
      %1060 = vmatprep.subr.bf16.mxu0 0
      %1061 = vmatpush1.bf16.msra.mxu0 0
      %1062 = vmatprep.subr.bf16.mxu0 0
      %1063 = vmatpush1.bf16.msra.mxu0 0
      %1064 = vmatprep.subr.bf16.mxu0 0
      %1065 = vmatpush1.bf16.msra.mxu0 0
      %1066 = vmatprep.subr.bf16.mxu0 0
      %1067 = vmatpush1.bf16.msra.mxu0 0
      %1068 = vmatprep.subr.bf16.mxu0 0
      %1069 = vmatpush1.bf16.msra.mxu0 0
      %1070 = vmatprep.subr.bf16.mxu0 0
      %1071 = vmatpush1.bf16.msra.mxu0 0
      %1072 = vmatprep.subr.bf16.mxu0 0
      %1073 = vmatpush1.bf16.msra.mxu0 0
      %1074 = vmatprep.subr.bf16.mxu0 0
      %1075 = vmatpush1.bf16.msra.mxu0 0
      %1076 = vmatprep.subr.bf16.mxu0 0
      %1077 = vmatpush1.bf16.msra.mxu0 0
      %1078 = vmatprep.subr.bf16.mxu0 0
      %1079 = vmatpush1.bf16.msra.mxu0 0
      %1080 = vmatprep.mubr.bf16.mxu0 0
      %1081 = vmatmul.mubr.bf16.gmra.mrb[0].mxu0 %v998
      %v1082 = vpop.f32.mrb[0].mxu0
      %v1083 = vadd.f32 0.0, %v1082
      %v1084 = vpop.f32.mrb[0].mxu0
      %v1085 = vpop.f32.mrb[0].mxu0
      %v1086 = vadd.f32 0.0, %v1085
      %v1087 = vpop.f32.mrb[0].mxu0
      %1088 = vmatprep.mubr.bf16.mxu0 0
      %1089 = vmatmul.mubr.bf16.gmra.mrb[0].mxu0 %v1001
      %v1090 = vpop.f32.mrb[0].mxu0
      %v1091 = vadd.f32 0.0, %v1090
      %v1092 = vpop.f32.mrb[0].mxu0
      %v1093 = vpop.f32.mrb[0].mxu0
      %v1094 = vadd.f32 0.0, %v1093
      %v1095 = vpop.f32.mrb[0].mxu0
      %1096 = vmatprep.mubr.bf16.mxu0 0
      %1097 = vmatmul.mubr.bf16.gmra.mrb[0].mxu0 %v1004
      %v1098 = vpop.f32.mrb[0].mxu0
      %v1099 = vadd.f32 0.0, %v1098
      %v1100 = vpop.f32.mrb[0].mxu0
      %v1101 = vpop.f32.mrb[0].mxu0
      %v1102 = vadd.f32 0.0, %v1101
      %v1103 = vpop.f32.mrb[0].mxu0
      %1104 = vmatprep.mubr.bf16.mxu0 0
      %1105 = vmatmul.mubr.bf16.gmra.mrb[0].mxu0 %v1007
      %v1106 = vpop.f32.mrb[0].mxu0
      %v1107 = vadd.f32 0.0, %v1106
      %v1108 = vpop.f32.mrb[0].mxu0
      %v1109 = vpop.f32.mrb[0].mxu0
      %v1110 = vadd.f32 0.0, %v1109
      %v1111 = vpop.f32.mrb[0].mxu0
      %1112 = vmatprep.mubr.bf16.mxu0 0
      %1113 = vmatmul.mubr.bf16.gmra.mrb[0].mxu0 %v1010
      %v1114 = vpop.f32.mrb[0].mxu0
      %v1115 = vadd.f32 0.0, %v1114
      %v1116 = vpop.f32.mrb[0].mxu0
      %v1117 = vpop.f32.mrb[0].mxu0
      %v1118 = vadd.f32 0.0, %v1117
      %v1119 = vpop.f32.mrb[0].mxu0
      %1120 = vmatprep.mubr.bf16.mxu0 0
      %1121 = vmatmul.mubr.bf16.gmra.mrb[0].mxu0 %v1013
      %v1122 = vpop.f32.mrb[0].mxu0
      %v1123 = vadd.f32 0.0, %v1122
      %v1124 = vpop.f32.mrb[0].mxu0
      %v1125 = vpop.f32.mrb[0].mxu0
      %v1126 = vadd.f32 0.0, %v1125
      %v1127 = vpop.f32.mrb[0].mxu0
      %1128 = vmatprep.mubr.bf16.mxu0 0
      %1129 = vmatmul.mubr.bf16.gmra.mrb[0].mxu0 %v1016
      %v1130 = vpop.f32.mrb[0].mxu0
      %v1131 = vadd.f32 0.0, %v1130
      %v1132 = vpop.f32.mrb[0].mxu0
      %v1133 = vpop.f32.mrb[0].mxu0
      %v1134 = vadd.f32 0.0, %v1133
      %v1135 = vpop.f32.mrb[0].mxu0
      %1136 = vmatprep.mubr.bf16.mxu0 0
      %1137 = vmatmul.mubr.bf16.gmra.mrb[0].mxu0 %v1019
      %v1138 = vpop.f32.mrb[0].mxu0
      %v1139 = vadd.f32 0.0, %v1138
      %v1140 = vpop.f32.mrb[0].mxu0
      %v1141 = vpop.f32.mrb[0].mxu0
      %v1142 = vadd.f32 0.0, %v1141
      %v1143 = vpop.f32.mrb[0].mxu0
      %1144 = vmatprep.mubr.bf16.mxu0 0
      %1145 = vmatmul.mubr.bf16.gmra.mrb[0].mxu0 %v1022
      %v1146 = vpop.f32.mrb[0].mxu0
      %v1147 = vadd.f32 0.0, %v1146
      %v1148 = vpop.f32.mrb[0].mxu0
      %v1149 = vpop.f32.mrb[0].mxu0
      %v1150 = vadd.f32 0.0, %v1149
      %v1151 = vpop.f32.mrb[0].mxu0
      %1152 = vmatprep.mubr.bf16.mxu0 0
      %1153 = vmatmul.mubr.bf16.gmra.mrb[0].mxu0 %v1025
      %v1154 = vpop.f32.mrb[0].mxu0
      %v1155 = vadd.f32 0.0, %v1154
      %v1156 = vpop.f32.mrb[0].mxu0
      %v1157 = vpop.f32.mrb[0].mxu0
      %v1158 = vadd.f32 0.0, %v1157
      %v1159 = vpop.f32.mrb[0].mxu0
      %1160 = vmatprep.mubr.bf16.mxu0 0
      %1161 = vmatmul.mubr.bf16.gmra.mrb[0].mxu0 %v1028
      %v1162 = vpop.f32.mrb[0].mxu0
      %v1163 = vadd.f32 0.0, %v1162
      %v1164 = vpop.f32.mrb[0].mxu0
      %v1165 = vpop.f32.mrb[0].mxu0
      %v1166 = vadd.f32 0.0, %v1165
      %v1167 = vpop.f32.mrb[0].mxu0
      %1168 = vmatprep.mubr.bf16.mxu0 0
      %1169 = vmatmul.mubr.bf16.gmra.mrb[0].mxu0 %v1031
      %v1170 = vpop.f32.mrb[0].mxu0
      %v1171 = vadd.f32 0.0, %v1170
      %v1172 = vpop.f32.mrb[0].mxu0
      %v1173 = vpop.f32.mrb[0].mxu0
      %v1174 = vadd.f32 0.0, %v1173
      %v1175 = vpop.f32.mrb[0].mxu0
      %1176 = vmatprep.mubr.bf16.mxu0 0
      %1177 = vmatmul.mubr.bf16.gmra.mrb[0].mxu0 %v1034
      %v1178 = vpop.f32.mrb[0].mxu0
      %v1179 = vadd.f32 0.0, %v1178
      %v1180 = vpop.f32.mrb[0].mxu0
      %v1181 = vpop.f32.mrb[0].mxu0
      %v1182 = vadd.f32 0.0, %v1181
      %v1183 = vpop.f32.mrb[0].mxu0
      %1184 = vmatprep.mubr.bf16.mxu0 0
      %1185 = vmatmul.mubr.bf16.gmra.mrb[0].mxu0 %v1037
      %v1186 = vpop.f32.mrb[0].mxu0
      %v1187 = vadd.f32 0.0, %v1186
      %v1188 = vpop.f32.mrb[0].mxu0
      %v1189 = vpop.f32.mrb[0].mxu0
      %v1190 = vadd.f32 0.0, %v1189
      %v1191 = vpop.f32.mrb[0].mxu0
      %1192 = vmatprep.mubr.bf16.mxu0 0
      %1193 = vmatmul.mubr.bf16.gmra.mrb[0].mxu0 %v1040
      %v1194 = vpop.f32.mrb[0].mxu0
      %v1195 = vadd.f32 0.0, %v1194
      %v1196 = vpop.f32.mrb[0].mxu0
      %v1197 = vpop.f32.mrb[0].mxu0
      %v1198 = vadd.f32 0.0, %v1197
      %v1199 = vpop.f32.mrb[0].mxu0
      %1200 = vmatprep.mubr.bf16.mxu0 0
      %1201 = vmatmul.mubr.bf16.gmra.mrb[0].mxu0 %v1043
      %v1202 = vpop.f32.mrb[0].mxu0
      %v1203 = vadd.f32 0.0, %v1202
      %v1204 = vpop.f32.mrb[0].mxu0
      %v1205 = vpop.f32.mrb[0].mxu0
      %v1206 = vadd.f32 0.0, %v1205
      %v1207 = vpop.f32.mrb[0].mxu0
      %1208 = vdwg.mxu0
      %v1209 = vadd.f32 %v747, %v1083
      %v1210 = vadd.f32 %v750, %v1086
      %v1211 = vadd.f32 %v755, %v1091
      %v1212 = vadd.f32 %v758, %v1094
      %v1213 = vadd.f32 %v763, %v1099
      %v1214 = vadd.f32 %v766, %v1102
      %v1215 = vadd.f32 %v771, %v1107
      %v1216 = vadd.f32 %v774, %v1110
      %v1217 = vadd.f32 %v779, %v1115
      %v1218 = vadd.f32 %v782, %v1118
      %v1219 = vadd.f32 %v787, %v1123
      %v1220 = vadd.f32 %v790, %v1126
      %v1221 = vadd.f32 %v795, %v1131
      %v1222 = vadd.f32 %v798, %v1134
      %v1223 = vadd.f32 %v803, %v1139
      %v1224 = vadd.f32 %v806, %v1142
      %v1225 = vadd.f32 %v811, %v1147
      %v1226 = vadd.f32 %v814, %v1150
      %v1227 = vadd.f32 %v819, %v1155
      %v1228 = vadd.f32 %v822, %v1158
      %v1229 = vadd.f32 %v827, %v1163
      %v1230 = vadd.f32 %v830, %v1166
      %v1231 = vadd.f32 %v835, %v1171
      %v1232 = vadd.f32 %v838, %v1174
      %v1233 = vadd.f32 %v843, %v1179
      %v1234 = vadd.f32 %v846, %v1182
      %v1235 = vadd.f32 %v851, %v1187
      %v1236 = vadd.f32 %v854, %v1190
      %v1237 = vadd.f32 %v859, %v1195
      %v1238 = vadd.f32 %v862, %v1198
      %v1239 = vadd.f32 %v867, %v1203
      %v1240 = vadd.f32 %v870, %v1206
      %1241 = vst [vmem:[%s197] sm:$0xff] %v1209
      %1242 = vst [vmem:[%s197 + $0x8] sm:$0xff] %v1210
      %1243 = vst [vmem:[%s197 + $0x10] sm:$0xff] %v1211
      %1244 = vst [vmem:[%s197 + $0x18] sm:$0xff] %v1212
      %1245 = vst [vmem:[%s197 + $0x20] sm:$0xff] %v1213
      %1246 = vst [vmem:[%s197 + $0x28] sm:$0xff] %v1214
      %1247 = vst [vmem:[%s197 + $0x30] sm:$0xff] %v1215
      %1248 = vst [vmem:[%s197 + $0x38] sm:$0xff] %v1216
      %1249 = vst [vmem:[%s197 + $0x40] sm:$0xff] %v1217
      %1250 = vst [vmem:[%s197 + $0x48] sm:$0xff] %v1218
      %1251 = vst [vmem:[%s197 + $0x50] sm:$0xff] %v1219
      %1252 = vst [vmem:[%s197 + $0x58] sm:$0xff] %v1220
      %1253 = vst [vmem:[%s197 + $0x60] sm:$0xff] %v1221
      %1254 = vst [vmem:[%s197 + $0x68] sm:$0xff] %v1222
      %1255 = vst [vmem:[%s197 + $0x70] sm:$0xff] %v1223
      %1256 = vst [vmem:[%s197 + $0x78] sm:$0xff] %v1224
      %1257 = vst [vmem:[%s197 + $0x80] sm:$0xff] %v1225
      %1258 = vst [vmem:[%s197 + $0x88] sm:$0xff] %v1226
      %1259 = vst [vmem:[%s197 + $0x90] sm:$0xff] %v1227
      %1260 = vst [vmem:[%s197 + $0x98] sm:$0xff] %v1228
      %1261 = vst [vmem:[%s197 + $0xa0] sm:$0xff] %v1229
      %1262 = vst [vmem:[%s197 + $0xa8] sm:$0xff] %v1230
      %1263 = vst [vmem:[%s197 + $0xb0] sm:$0xff] %v1231
      %1264 = vst [vmem:[%s197 + $0xb8] sm:$0xff] %v1232
      %1265 = vst [vmem:[%s197 + $0xc0] sm:$0xff] %v1233
      %1266 = vst [vmem:[%s197 + $0xc8] sm:$0xff] %v1234
      %1267 = vst [vmem:[%s197 + $0xd0] sm:$0xff] %v1235
      %1268 = vst [vmem:[%s197 + $0xd8] sm:$0xff] %v1236
      %1269 = vst [vmem:[%s197 + $0xe0] sm:$0xff] %v1237
      %1270 = vst [vmem:[%s197 + $0xe8] sm:$0xff] %v1238
      %1271 = vst [vmem:[%s197 + $0xf0] sm:$0xff] %v1239
      %1272 = vst [vmem:[%s197 + $0xf8] sm:$0xff] %v1240
      %s1273 = smul.u32 32, %s20
      %p1274 = scmp.lt.s32.totalorder %s18, 1
      %s1275 = scalar_select %p1274, %s18, 1
      %p1276 = scmp.lt.s32.totalorder %s1273, 31
      %s1277 = scalar_select %p1276, %s1273, 31
      %p1278 = scmp.lt.s32.totalorder %s19, 0
      %s1279 = scalar_select %p1278, %s19, 0
      %s1280 = sadd.s32 %s1279, %s1277
      %s1281 = smul.addr %s1275, 32
      %s1282 = sadd.s32 %s1280, %s1281
      %s1283 = smul.addr %s1282, 8
      %s1284 = scalar_lea.vmem %s2, %s1283
      // Predicated region
      $region29: #{conv2d_pallas.1} parent=27 // pred_check
        %p1285 = pneg %p106
      $region30: #{conv2d_pallas.1} parent=27 // pred_check_branch
        %1287 = sbr.rel (%p1285) target = $region32
      $region31: #{conv2d_pallas.1} parent=27 // pred_region
        %s1288 = smul.u32 32, %s20
      $region32: #{conv2d_pallas.1} parent=27 // pred_fallthru
        _
    $region28: #{conv2d_pallas.1} parent=5 // pred_fallthru
      _
    %p1289 = scmp.le.s32.totalorder 2, %s8
    // Predicated region
    $region33: #{conv2d_pallas.1} parent=5 // pred_check
      %p1290 = pneg %p1289
    $region34: #{conv2d_pallas.1} parent=5 // pred_check_branch
      %1292 = sbr.rel (%p1290) target = $region36
    $region35: #{conv2d_pallas.1} parent=5 // pred_region
      %s1293 = ssub.s32 %s8, 2
      // Predicated region
      $region37: #{conv2d_pallas.1} parent=35 // pred_check
        %p1294 = pneg %p112
      $region38: #{conv2d_pallas.1} parent=35 // pred_check_branch
        %1296 = sbr.rel (%p1294) target = $region40
      $region39: #{conv2d_pallas.1} parent=35 // pred_region
        %s1297 = smul.u32 32, %s23
        %p1298 = scmp.lt.s32.totalorder %s21, 1
        %s1299 = scalar_select %p1298, %s21, 1
        %p1300 = scmp.lt.s32.totalorder %s1297, 31
        %s1301 = scalar_select %p1300, %s1297, 31
        %p1302 = scmp.lt.s32.totalorder %s22, 0
        %s1303 = scalar_select %p1302, %s22, 0
        %s1304 = sadd.s32 %s1303, %s1301
        %s1305 = smul.addr %s1299, 32
        %s1306 = sadd.s32 %s1304, %s1305
        %s1307 = smul.addr %s1306, 8
        %s1308 = scalar_lea.vmem %s2, %s1307
      $region40: #{conv2d_pallas.1} parent=35 // pred_fallthru
        _
    $region36: #{conv2d_pallas.1} parent=5 // pred_fallthru
      _
  $region6: #{conv2d_pallas.1} parent=0 // loop_footer
    %s12 = sadd.s32 1, %s8
  $region7: #{conv2d_pallas.1} parent=0 // loop_footer_branch
    %7 = sbr.rel target = $region3
  $region8: #{conv2d_pallas.1} parent=0 // loop_exit
    _

</llo_original>
